<compile_context>
chip_gen: v6e
topology: v6e:2x2x1
jax: 0.10.0
libtpu: 0.0.40
codegen_flags: <defaults>
</compile_context>

<pallas_src>
import jax
import jax.numpy as jnp
from jax.experimental import pallas as pl
from jax.experimental.pallas import tpu as pltpu


# ---------------------------------------------------------------------------
# Fused kernel: all conv layers + 1x1 classifier + sigmoid + mean over L,
# for TB batch elements per grid step.
# ---------------------------------------------------------------------------
def _make_fused_kernel(TB, L, Cin, H, n_class, n_hidden, compute_dtype):
    def conv3_relu(h, w, b):
        # h: (TB, L, C)   compute_dtype activation (channels on lanes)
        # w: (3C, Cout)   weights, taps stacked on the contraction axis
        #                 (tap order: x[l-1], x[l], x[l+1])
        # b: (1, Cout)    f32 bias
        # Returns relu(conv1d_k3_pad1(h) + b) as (TB, L, Cout) in compute_dtype.
        C = h.shape[-1]
        Cout = w.shape[-1]
        z = jnp.zeros((TB, 1, C), compute_dtype)
        hp = jnp.concatenate([z, h, z], axis=1)                     # (TB, L+2, C)
        ha = jnp.concatenate(
            [hp[:, 0:L, :], hp[:, 1:L + 1, :], hp[:, 2:L + 2, :]],
            axis=2)                                                 # (TB, L, 3C)
        y = jnp.dot(ha.reshape(TB * L, 3 * C), w,
                    preferred_element_type=jnp.float32)             # f32 acc
        y = jnp.maximum(y + b, 0.0)                                 # bias+ReLU, f32
        return y.astype(compute_dtype).reshape(TB, L, Cout)

    def kernel(x_ref, w1_ref, b1_ref, wl_ref, bl_ref, wc_ref, o_ref):
        # x_ref : (TB, L, Cin)    TB batch elements (channels-last, compute_dtype)
        # w1_ref: (3*Cin, H)      conv1 weights (taps flattened into K)
        # b1_ref: (1, H)          conv1 bias (f32)
        # wl_ref: (NL, 3*H, H)    stacked hidden-layer conv weights
        # bl_ref: (NL, 1, H)      stacked hidden-layer biases (f32)
        # wc_ref: (H, n_class)    1x1 classifier weights (no bias)
        # o_ref : (1, TB, n_class) mean over L of sigmoid(logits)
        h = conv3_relu(x_ref[...], w1_ref[...], b1_ref[...])
        for j in range(n_hidden):                 # static unroll over layers
            h = conv3_relu(h, wl_ref[j], bl_ref[j])

        # 1x1 classifier + sigmoid + mean over sequence, all in f32.
        logits = jnp.dot(h.reshape(TB * L, H), wc_ref[...],
                         preferred_element_type=jnp.float32)        # (TB*L, n_class)
        # sigmoid: exp on the EUP; reciprocal routed to the EUP as well.
        probs = pl.reciprocal(1.0 + jnp.exp(-logits), approx=True)
        out = jnp.mean(probs.reshape(TB, L, n_class), axis=1)       # (TB, n_class)
        o_ref[...] = out.reshape(1, TB, n_class).astype(o_ref.dtype)

    return kernel


def _pick_batch_block(B, L):
    # Target ~256 MXU M-rows per grid step (v6e/v7x 256x256; also >= 128 for
    # v5e), but keep at least 2 grid steps when B >= 2 so both v7x TCs are fed.
    tb = max(1, min(B, pl.cdiv(256, L)))
    if B >= 2 and pl.cdiv(B, tb) < 2:
        tb = pl.cdiv(B, 2)
    return tb


def cnnnet_forward(x, params, compute_dtype=jnp.float32, batch_block=None):
    """x: (B, L, in_dim) channels-last -> (B, n_class).

    Matches CNNnet.forward (which permutes to NCL internally); channels stay
    on the last (lane) axis so every conv is an MXU matmul.
    compute_dtype=jnp.bfloat16 is valid on all chips (bf16 matmul operands,
    f32 accumulation and f32 elementwise math).
    """
    B, L, Cin = x.shape
    H = params["b1"].shape[0]
    n_class = params["wc"].shape[-1]
    n_hidden = len(params["layers"])

    TB = batch_block if batch_block is not None else _pick_batch_block(B, L)
    G = pl.cdiv(B, TB)
    Bpad = G * TB

    xk = x.astype(compute_dtype)
    if Bpad != B:
        # Tail block: zero-pad the batch; padded rows are computed and dropped.
        xk = jnp.pad(xk, ((0, Bpad - B), (0, 0), (0, 0)))

    # Flatten the 3 conv taps onto the contraction axis: (3, C, Cout) -> (3C, Cout).
    w1 = params["w1"].reshape(3 * Cin, H).astype(compute_dtype)
    b1 = params["b1"].reshape(1, H).astype(jnp.float32)
    if n_hidden > 0:
        wl = jnp.stack([w.reshape(3 * H, H) for (w, _) in params["layers"]]
                       ).astype(compute_dtype)                      # (NL, 3H, H)
        bl = jnp.stack([b.reshape(1, H) for (_, b) in params["layers"]]
                       ).astype(jnp.float32)                        # (NL, 1, H)
    else:
        # Dummy operands (never read when n_hidden == 0); avoids 0-sized arrays.
        wl = jnp.zeros((1, 3 * H, H), compute_dtype)
        bl = jnp.zeros((1, 1, H), jnp.float32)
    NL = wl.shape[0]
    wc = params["wc"].astype(compute_dtype)

    kernel = _make_fused_kernel(TB, L, Cin, H, n_class, n_hidden, compute_dtype)

    itemsize = jnp.dtype(compute_dtype).itemsize
    flops = 2 * B * L * (3 * Cin * H + n_hidden * 3 * H * H + H * n_class)
    bytes_accessed = (Bpad * L * Cin * itemsize
                      + (3 * Cin * H + NL * 3 * H * H + H * n_class) * itemsize
                      + (1 + NL) * H * 4
                      + Bpad * n_class * 4)
    cost = pl.CostEstimate(flops=flops,
                           transcendentals=B * L * n_class,
                           bytes_accessed=bytes_accessed)

    out3 = pl.pallas_call(
        kernel,
        out_shape=jax.ShapeDtypeStruct((G, TB, n_class), jnp.float32),
        grid=(G,),
        in_specs=[
            pl.BlockSpec((TB, L, Cin), lambda i: (i, 0, 0)),     # TB batch rows
            pl.BlockSpec((3 * Cin, H), lambda i: (0, 0)),        # conv1 weights
            pl.BlockSpec((1, H), lambda i: (0, 0)),              # conv1 bias
            pl.BlockSpec((NL, 3 * H, H), lambda i: (0, 0, 0)),   # hidden weights
            pl.BlockSpec((NL, 1, H), lambda i: (0, 0, 0)),       # hidden biases
            pl.BlockSpec((H, n_class), lambda i: (0, 0)),        # classifier
        ],
        out_specs=pl.BlockSpec((1, TB, n_class), lambda i: (i, 0, 0)),
        compiler_params=pltpu.CompilerParams(
            # Batch blocks are independent -> both v7x TensorCores / megacore.
            dimension_semantics=("parallel",),
        ),
        cost_estimate=cost,
    )(xk, w1, b1, wl, bl, wc)

    return out3.reshape(Bpad, n_class)[:B]


# ---------------------------------------------------------------------------
# Parameters and pure-JAX reference (mirrors CNNnet.forward semantics)
# ---------------------------------------------------------------------------
def init_params(key, in_dim, hidden_dim, n_layer, n_class):
    ks = jax.random.split(key, 2 * n_layer + 1)
    params = {}
    # conv1: PyTorch weight (hidden, in_dim, 3) stored here as (3, in_dim, hidden)
    params["w1"] = 0.1 * jax.random.normal(ks[0], (3, in_dim, hidden_dim), jnp.float32)
    params["b1"] = 0.1 * jax.random.normal(ks[1], (hidden_dim,), jnp.float32)
    layers = []
    for i in range(1, n_layer):
        wk = 0.1 * jax.random.normal(ks[2 * i], (3, hidden_dim, hidden_dim), jnp.float32)
        bk = 0.1 * jax.random.normal(ks[2 * i + 1], (hidden_dim,), jnp.float32)
        layers.append((wk, bk))
    params["layers"] = layers
    # classifier: PyTorch weight (n_class, hidden, 1) stored as (hidden, n_class)
    params["wc"] = 0.1 * jax.random.normal(ks[-1], (hidden_dim, n_class), jnp.float32)
    return params


def cnnnet_reference(x, params):
    def conv(x, w, b):
        xp = jnp.pad(x, ((0, 0), (1, 1), (0, 0)))
        L = x.shape[1]
        y = (jnp.einsum("blc,cd->bld", xp[:, 0:L], w[0])
             + jnp.einsum("blc,cd->bld", xp[:, 1:L + 1], w[1])
             + jnp.einsum("blc,cd->bld", xp[:, 2:L + 2], w[2])
             + b[None, None, :])
        return jnp.maximum(y, 0.0)

    h = conv(x, params["w1"], params["b1"])
    for (w, b) in params["layers"]:
        h = conv(h, w, b)
    y = jnp.einsum("blh,hc->blc", h, params["wc"])
    s = jax.nn.sigmoid(y)
    return jnp.mean(s, axis=1)


if __name__ == "__main__":
    B, L, in_dim, hidden_dim, n_layer, n_class = 8, 16, 8, 32, 3, 4

    key = jax.random.PRNGKey(0)
    kx, kp, kx2 = jax.random.split(key, 3)
    x = jax.random.normal(kx, (B, L, in_dim), jnp.float32)
    params = init_params(kp, in_dim, hidden_dim, n_layer, n_class)

    ref = jax.block_until_ready(cnnnet_reference(x, params))

    # f32 matmul-operand path.  Tolerance covers the fused-K accumulation
    # structure and the EUP approx-reciprocal in the sigmoid.
    out = jax.block_until_ready(cnnnet_forward(x, params))
    assert out.shape == (B, n_class)
    assert jnp.allclose(out, ref, atol=1e-2, rtol=1e-2)

    # bf16 matmul-operand path (valid on v5e/v6e/v7x); f32 accumulate/elementwise.
    out_bf16 = jax.block_until_ready(
        cnnnet_forward(x, params, compute_dtype=jnp.bfloat16))
    assert out_bf16.shape == (B, n_class)
    assert jnp.allclose(out_bf16, ref, atol=3e-2, rtol=3e-2)

    # Ragged batch (B not divisible by the batch block): zero-padded tail block.
    x2 = jax.random.normal(kx2, (3, L, in_dim), jnp.float32)
    ref2 = jax.block_until_ready(cnnnet_reference(x2, params))
    out2 = jax.block_until_ready(cnnnet_forward(x2, params))
    assert out2.shape == (3, n_class)
    assert jnp.allclose(out2, ref2, atol=1e-2, rtol=1e-2)

    print("KERNEL_OK")
</pallas_src>

<mosaic_0001>
module attributes {stable_mosaic.version = 11 : i64} {
  func.func @kernel(%arg0: i32, %arg1: memref<4x16x8xf32, #tpu.memory_space<vmem>>, %arg2: memref<24x32xf32, #tpu.memory_space<vmem>>, %arg3: memref<1x32xf32, #tpu.memory_space<vmem>>, %arg4: memref<2x96x32xf32, #tpu.memory_space<vmem>>, %arg5: memref<2x1x32xf32, #tpu.memory_space<vmem>>, %arg6: memref<32x4xf32, #tpu.memory_space<vmem>>, %arg7: memref<1x4x4xf32, #tpu.memory_space<vmem>>) attributes {dimension_semantics = [#tpu.dimension_semantics<parallel>], iteration_bounds = array<i64: 2>, scalar_prefetch = 0 : i64, scratch_operands = 0 : i64, tpu.core_type = #tpu.core_type<tc>, window_params = [{transform_indices = @transform_0, window_bounds = array<i64: 4, 16, 8>}, {pipeline_mode = #tpu.pipeline_mode<synchronous>, transform_indices = @transform_1, window_bounds = array<i64: 24, 32>}, {pipeline_mode = #tpu.pipeline_mode<synchronous>, transform_indices = @transform_2, window_bounds = array<i64: 1, 32>}, {pipeline_mode = #tpu.pipeline_mode<synchronous>, transform_indices = @transform_3, window_bounds = array<i64: 2, 96, 32>}, {pipeline_mode = #tpu.pipeline_mode<synchronous>, transform_indices = @transform_4, window_bounds = array<i64: 2, 1, 32>}, {pipeline_mode = #tpu.pipeline_mode<synchronous>, transform_indices = @transform_5, window_bounds = array<i64: 32, 4>}, {transform_indices = @transform_6, window_bounds = array<i64: 1, 4, 4>}]} {
    %c0 = arith.constant 0 : index
    %c0_0 = arith.constant 0 : index
    %c0_1 = arith.constant 0 : index
    %0 = vector.load %arg1[%c0, %c0_0, %c0_1] : memref<4x16x8xf32, #tpu.memory_space<vmem>>, vector<4x16x8xf32>
    %c0_2 = arith.constant 0 : index
    %c0_3 = arith.constant 0 : index
    %1 = vector.load %arg2[%c0_2, %c0_3] : memref<24x32xf32, #tpu.memory_space<vmem>>, vector<24x32xf32>
    %c0_4 = arith.constant 0 : index
    %c0_5 = arith.constant 0 : index
    %2 = vector.load %arg3[%c0_4, %c0_5] : memref<1x32xf32, #tpu.memory_space<vmem>>, vector<1x32xf32>
    %cst = arith.constant 0.000000e+00 : f32
    %3 = vector.broadcast %cst : f32 to vector<4x1x8xf32>
    %4 = tpu.concatenate %3, %0, %3 in 1 : vector<4x1x8xf32>, vector<4x16x8xf32>, vector<4x1x8xf32> -> vector<4x18x8xf32>
    %5 = vector.extract_strided_slice %4 {offsets = [0, 0, 0], sizes = [4, 16, 8], strides = [1, 1, 1]} : vector<4x18x8xf32> to vector<4x16x8xf32>
    %6 = vector.extract_strided_slice %4 {offsets = [0, 1, 0], sizes = [4, 16, 8], strides = [1, 1, 1]} : vector<4x18x8xf32> to vector<4x16x8xf32>
    %7 = vector.extract_strided_slice %4 {offsets = [0, 2, 0], sizes = [4, 16, 8], strides = [1, 1, 1]} : vector<4x18x8xf32> to vector<4x16x8xf32>
    %8 = tpu.concatenate %5, %6, %7 in 2 : vector<4x16x8xf32>, vector<4x16x8xf32>, vector<4x16x8xf32> -> vector<4x16x24xf32>
    %9 = vector.shape_cast %8 : vector<4x16x24xf32> to vector<64x24xf32>
    %cst_6 = arith.constant dense<0.000000e+00> : vector<64x32xf32>
    %10 = tpu.matmul %9, %1, %cst_6 {dimension_numbers = #tpu.dot_dimension_numbers<[1], [0], [0], [1], [0, 0, 1, 1], [], []>} : vector<64x24xf32>, vector<24x32xf32>, vector<64x32xf32> -> vector<64x32xf32>
    %11 = vector.broadcast %2 : vector<1x32xf32> to vector<64x32xf32>
    %12 = arith.addf %10, %11 : vector<64x32xf32>
    %cst_7 = arith.constant 0.000000e+00 : f32
    %13 = vector.broadcast %cst_7 : f32 to vector<64x32xf32>
    %14 = arith.maximumf %12, %13 : vector<64x32xf32>
    %15 = vector.shape_cast %14 : vector<64x32xf32> to vector<4x16x32xf32>
    %c0_8 = arith.constant 0 : index
    %c0_9 = arith.constant 0 : index
    %c0_10 = arith.constant 0 : index
    %16 = vector.load %arg4[%c0_8, %c0_9, %c0_10] : memref<2x96x32xf32, #tpu.memory_space<vmem>>, vector<1x96x32xf32>
    %17 = vector.shape_cast %16 : vector<1x96x32xf32> to vector<96x32xf32>
    %c0_11 = arith.constant 0 : index
    %c0_12 = arith.constant 0 : index
    %c0_13 = arith.constant 0 : index
    %18 = vector.load %arg5[%c0_11, %c0_12, %c0_13] : memref<2x1x32xf32, #tpu.memory_space<vmem>>, vector<1x1x32xf32>
    %19 = vector.shape_cast %18 : vector<1x1x32xf32> to vector<1x32xf32>
    %cst_14 = arith.constant 0.000000e+00 : f32
    %20 = vector.broadcast %cst_14 : f32 to vector<4x1x32xf32>
    %21 = tpu.concatenate %20, %15, %20 in 1 : vector<4x1x32xf32>, vector<4x16x32xf32>, vector<4x1x32xf32> -> vector<4x18x32xf32>
    %22 = vector.extract_strided_slice %21 {offsets = [0, 0, 0], sizes = [4, 16, 32], strides = [1, 1, 1]} : vector<4x18x32xf32> to vector<4x16x32xf32>
    %23 = vector.extract_strided_slice %21 {offsets = [0, 1, 0], sizes = [4, 16, 32], strides = [1, 1, 1]} : vector<4x18x32xf32> to vector<4x16x32xf32>
    %24 = vector.extract_strided_slice %21 {offsets = [0, 2, 0], sizes = [4, 16, 32], strides = [1, 1, 1]} : vector<4x18x32xf32> to vector<4x16x32xf32>
    %25 = tpu.concatenate %22, %23, %24 in 2 : vector<4x16x32xf32>, vector<4x16x32xf32>, vector<4x16x32xf32> -> vector<4x16x96xf32>
    %26 = vector.shape_cast %25 : vector<4x16x96xf32> to vector<64x96xf32>
    %cst_15 = arith.constant dense<0.000000e+00> : vector<64x32xf32>
    %27 = tpu.matmul %26, %17, %cst_15 {dimension_numbers = #tpu.dot_dimension_numbers<[1], [0], [0], [1], [0, 0, 1, 1], [], []>} : vector<64x96xf32>, vector<96x32xf32>, vector<64x32xf32> -> vector<64x32xf32>
    %28 = vector.broadcast %19 : vector<1x32xf32> to vector<64x32xf32>
    %29 = arith.addf %27, %28 : vector<64x32xf32>
    %cst_16 = arith.constant 0.000000e+00 : f32
    %30 = vector.broadcast %cst_16 : f32 to vector<64x32xf32>
    %31 = arith.maximumf %29, %30 : vector<64x32xf32>
    %32 = vector.shape_cast %31 : vector<64x32xf32> to vector<4x16x32xf32>
    %c1 = arith.constant 1 : index
    %c0_17 = arith.constant 0 : index
    %c0_18 = arith.constant 0 : index
    %33 = vector.load %arg4[%c1, %c0_17, %c0_18] : memref<2x96x32xf32, #tpu.memory_space<vmem>>, vector<1x96x32xf32>
    %34 = vector.shape_cast %33 : vector<1x96x32xf32> to vector<96x32xf32>
    %c1_19 = arith.constant 1 : index
    %c0_20 = arith.constant 0 : index
    %c0_21 = arith.constant 0 : index
    %35 = vector.load %arg5[%c1_19, %c0_20, %c0_21] : memref<2x1x32xf32, #tpu.memory_space<vmem>>, vector<1x1x32xf32>
    %36 = vector.shape_cast %35 : vector<1x1x32xf32> to vector<1x32xf32>
    %cst_22 = arith.constant 0.000000e+00 : f32
    %37 = vector.broadcast %cst_22 : f32 to vector<4x1x32xf32>
    %38 = tpu.concatenate %37, %32, %37 in 1 : vector<4x1x32xf32>, vector<4x16x32xf32>, vector<4x1x32xf32> -> vector<4x18x32xf32>
    %39 = vector.extract_strided_slice %38 {offsets = [0, 0, 0], sizes = [4, 16, 32], strides = [1, 1, 1]} : vector<4x18x32xf32> to vector<4x16x32xf32>
    %40 = vector.extract_strided_slice %38 {offsets = [0, 1, 0], sizes = [4, 16, 32], strides = [1, 1, 1]} : vector<4x18x32xf32> to vector<4x16x32xf32>
    %41 = vector.extract_strided_slice %38 {offsets = [0, 2, 0], sizes = [4, 16, 32], strides = [1, 1, 1]} : vector<4x18x32xf32> to vector<4x16x32xf32>
    %42 = tpu.concatenate %39, %40, %41 in 2 : vector<4x16x32xf32>, vector<4x16x32xf32>, vector<4x16x32xf32> -> vector<4x16x96xf32>
    %43 = vector.shape_cast %42 : vector<4x16x96xf32> to vector<64x96xf32>
    %cst_23 = arith.constant dense<0.000000e+00> : vector<64x32xf32>
    %44 = tpu.matmul %43, %34, %cst_23 {dimension_numbers = #tpu.dot_dimension_numbers<[1], [0], [0], [1], [0, 0, 1, 1], [], []>} : vector<64x96xf32>, vector<96x32xf32>, vector<64x32xf32> -> vector<64x32xf32>
    %45 = vector.broadcast %36 : vector<1x32xf32> to vector<64x32xf32>
    %46 = arith.addf %44, %45 : vector<64x32xf32>
    %cst_24 = arith.constant 0.000000e+00 : f32
    %47 = vector.broadcast %cst_24 : f32 to vector<64x32xf32>
    %48 = arith.maximumf %46, %47 : vector<64x32xf32>
    %49 = vector.shape_cast %48 : vector<64x32xf32> to vector<4x16x32xf32>
    %50 = vector.shape_cast %49 : vector<4x16x32xf32> to vector<64x32xf32>
    %c0_25 = arith.constant 0 : index
    %c0_26 = arith.constant 0 : index
    %51 = vector.load %arg6[%c0_25, %c0_26] : memref<32x4xf32, #tpu.memory_space<vmem>>, vector<32x4xf32>
    %cst_27 = arith.constant dense<0.000000e+00> : vector<64x4xf32>
    %52 = tpu.matmul %50, %51, %cst_27 {dimension_numbers = #tpu.dot_dimension_numbers<[1], [0], [0], [1], [0, 0, 1, 1], [], []>} : vector<64x32xf32>, vector<32x4xf32>, vector<64x4xf32> -> vector<64x4xf32>
    %cst_28 = arith.constant 0.000000e+00 : f32
    %53 = vector.broadcast %cst_28 : f32 to vector<64x4xf32>
    %54 = arith.subf %53, %52 : vector<64x4xf32>
    %55 = math.exp %54 : vector<64x4xf32>
    %cst_29 = arith.constant 1.000000e+00 : f32
    %56 = vector.broadcast %cst_29 : f32 to vector<64x4xf32>
    %57 = arith.addf %56, %55 : vector<64x4xf32>
    %58 = tpu.reciprocal %57 {approx = true} : vector<64x4xf32> -> vector<64x4xf32>
    %59 = vector.shape_cast %58 : vector<64x4xf32> to vector<4x16x4xf32>
    %cst_30 = arith.constant dense<0.000000e+00> : vector<4x4xf32>
    %60 = vector.multi_reduction <add>, %59, %cst_30 [1] : vector<4x16x4xf32> to vector<4x4xf32>
    %cst_31 = arith.constant 1.600000e+01 : f32
    %61 = vector.broadcast %cst_31 : f32 to vector<4x4xf32>
    %62 = arith.divf %60, %61 : vector<4x4xf32>
    %63 = vector.shape_cast %62 : vector<4x4xf32> to vector<1x4x4xf32>
    %c0_32 = arith.constant 0 : index
    %c0_33 = arith.constant 0 : index
    %c0_34 = arith.constant 0 : index
    %64 = vector.load %arg7[%c0_32, %c0_33, %c0_34] : memref<1x4x4xf32, #tpu.memory_space<vmem>>, vector<1x4x4xf32>
    tpu.vector_store %arg7[%c0_32, %c0_33, %c0_34], %63 {strides = array<i32>} : memref<1x4x4xf32, #tpu.memory_space<vmem>>, vector<1x4x4xf32>,
    return
  }
  func.func @transform_0(%arg0: i32) -> (i32, i32, i32) {
    %c0_i32 = arith.constant 0 : i32
    %c0_i32_0 = arith.constant 0 : i32
    %c0_i32_1 = arith.constant 0 : i32
    return %arg0, %c0_i32, %c0_i32_0 : i32, i32, i32
  }
  func.func @transform_1(%arg0: i32) -> (i32, i32) {
    %c0_i32 = arith.constant 0 : i32
    %c0_i32_0 = arith.constant 0 : i32
    %c0_i32_1 = arith.constant 0 : i32
    return %c0_i32, %c0_i32_0 : i32, i32
  }
  func.func @transform_2(%arg0: i32) -> (i32, i32) {
    %c0_i32 = arith.constant 0 : i32
    %c0_i32_0 = arith.constant 0 : i32
    %c0_i32_1 = arith.constant 0 : i32
    return %c0_i32, %c0_i32_0 : i32, i32
  }
  func.func @transform_3(%arg0: i32) -> (i32, i32, i32) {
    %c0_i32 = arith.constant 0 : i32
    %c0_i32_0 = arith.constant 0 : i32
    %c0_i32_1 = arith.constant 0 : i32
    %c0_i32_2 = arith.constant 0 : i32
    return %c0_i32, %c0_i32_0, %c0_i32_1 : i32, i32, i32
  }
  func.func @transform_4(%arg0: i32) -> (i32, i32, i32) {
    %c0_i32 = arith.constant 0 : i32
    %c0_i32_0 = arith.constant 0 : i32
    %c0_i32_1 = arith.constant 0 : i32
    %c0_i32_2 = arith.constant 0 : i32
    return %c0_i32, %c0_i32_0, %c0_i32_1 : i32, i32, i32
  }
  func.func @transform_5(%arg0: i32) -> (i32, i32) {
    %c0_i32 = arith.constant 0 : i32
    %c0_i32_0 = arith.constant 0 : i32
    %c0_i32_1 = arith.constant 0 : i32
    return %c0_i32, %c0_i32_0 : i32, i32
  }
  func.func @transform_6(%arg0: i32) -> (i32, i32, i32) {
    %c0_i32 = arith.constant 0 : i32
    %c0_i32_0 = arith.constant 0 : i32
    %c0_i32_1 = arith.constant 0 : i32
    return %arg0, %c0_i32, %c0_i32_0 : i32, i32, i32
  }
}

</mosaic_0001>

<llo_original>
// kernel: tpu_custom_call.1
$region0: #{tpu_custom_call.1}
  #allocation0 [shape = 'u32[]', space=smem, size = 0x4, offset = 0x4, fixed_abs, tag = 'smem constant byte address 0x4 - core index']
  #allocation1 [shape = 'u32[144,128]{1,0:T(1,128)}', space=vmem, size = 0x12000, scoped, tag = 'internal scratch']
  %s0 = inlined_call_operand.vmem [shape: f32[8,16,8], index: 0, kind: input, shape index: {}]
  %s1 = inlined_call_operand.vmem [shape: f32[24,32], index: 1, kind: input, shape index: {}]
  %s2 = inlined_call_operand.vmem [shape: f32[1,32], index: 2, kind: input, shape index: {}]
  %s3 = inlined_call_operand.vmem [shape: f32[2,96,32], index: 3, kind: input, shape index: {}]
  %s4 = inlined_call_operand.vmem [shape: f32[2,1,32], index: 4, kind: input, shape index: {}]
  %s5 = inlined_call_operand.vmem [shape: f32[32,4], index: 5, kind: input, shape index: {}]
  %s6 = inlined_call_operand.hbm [shape: f32[2,4,4], index: 6, kind: output, shape index: {}]
  %s7 = sld [smem:[#allocation0]]
  $region57: #{tpu_custom_call.1} parent=0
    _
  %s9 = ssub.s32 1, %s7
  %s10 = scalar_select 0, %s9, %s7
  $region1: #{tpu_custom_call.1} parent=0
    #allocation2 [shape = 'u8[4096]{0}', space=vmem, size = 0x1000, scoped, tag = 'output window, operand 0']
    #allocation3 [shape = 's32[2]{0}', space=sflag, size = 0x8, scoped, tag = 'scoped memory for tpu_custom_call.1']
    %11 = vsyncpa [#allocation3], 0
    %s12 = scalar_lea.sflag [#allocation3], 1
    %13 = vsyncpa %s12, 0
    loop: start=0, step=1, limit=4
    $region2: #{tpu_custom_call.1} parent=1 // loop_pre_header
      _
    $region3: #{tpu_custom_call.1} parent=1 // loop_header
      %s15 = sphi 0, %s19
      %p16 = scmp.ge.s32.totalorder %s15, 4
      %s25 = sphi 0, %s27
      %s28 = sphi 0, %s25
      %s29 = sphi 0, %s28
      %s45 = sphi 0, %s29
      %s49 = sphi 0, %s49
      %s51 = sphi 0, %s49
      %s52 = sphi 0, %s51
      %s66 = sphi 0, %s52
      %s70 = sphi 0, %s70
      %s72 = sphi 0, %s70
      %s73 = sphi 0, %s72
      %s87 = sphi 0, %s73
      %s91 = sphi 0, %s91
      %s93 = sphi 0, %s91
      %s94 = sphi 0, %s93
      %s108 = sphi 0, %s94
      %s112 = sphi 0, %s112
      %s114 = sphi 0, %s112
      %s115 = sphi 0, %s114
      %s129 = sphi 0, %s115
      %s133 = sphi 0, %s133
      %s135 = sphi 0, %s133
      %s136 = sphi 0, %s135
      %s150 = sphi 0, %s136
      %s156 = sphi 0, %s158
      %s159 = sphi 0, %s156
      %s160 = sphi 0, %s159
      %s176 = sphi 0, %s160
    $region4: #{tpu_custom_call.1} parent=1 // loop_header_branch
      %18 = sbr.rel (%p16) target = $region8
    $region5: #{tpu_custom_call.1} parent=1 // loop_body
      %s20 = ssub.s32 %s15, 1
      %s21 = ssub.s32 %s15, 2
      %s22 = sadd.s32 %s15, 1
      %s23 = ssub.s32 %s15, %s22
      %p24 = scmp.eq.s32.totalorder %s23, 0
      %s26 = sadd.s32 %s25, 1
      %s27 = scalar_select %p24, %s25, %s26
      %p30 = pneg %p24
      %p31 = scmp.eq.s32.totalorder %s15, 1
      %p32 = por %p30, %p31
      %p33 = scmp.ne.s32.totalorder %s25, %s28
      %p34 = scmp.eq.s32.totalorder %s15, 0
      %p35 = por %p33, %p34
      %p36 = scmp.ne.s32.totalorder %s25, %s28
      %p37 = scmp.eq.s32.totalorder %s20, 1
      %p38 = por %p36, %p37
      %p39 = scmp.ne.s32.totalorder %s28, %s29
      %p40 = scmp.eq.s32.totalorder %s20, 0
      %p41 = por %p39, %p40
      %p42 = scmp.ne.s32.totalorder %s28, %s29
      %p43 = scmp.eq.s32.totalorder %s21, 1
      %p44 = por %p42, %p43
      %p46 = scmp.ne.s32.totalorder %s29, %s45
      %p47 = scmp.eq.s32.totalorder %s21, 0
      %p48 = por %p46, %p47
      %s50 = sadd.s32 %s49, 1
      %p53 = scmp.eq.s32.totalorder %s15, 1
      %p54 = scmp.ne.s32.totalorder %s49, %s51
      %p55 = scmp.eq.s32.totalorder %s15, 0
      %p56 = por %p54, %p55
      %p57 = scmp.ne.s32.totalorder %s49, %s51
      %p58 = scmp.eq.s32.totalorder %s20, 1
      %p59 = por %p57, %p58
      %p60 = scmp.ne.s32.totalorder %s51, %s52
      %p61 = scmp.eq.s32.totalorder %s20, 0
      %p62 = por %p60, %p61
      %p63 = scmp.ne.s32.totalorder %s51, %s52
      %p64 = scmp.eq.s32.totalorder %s21, 1
      %p65 = por %p63, %p64
      %p67 = scmp.ne.s32.totalorder %s52, %s66
      %p68 = scmp.eq.s32.totalorder %s21, 0
      %p69 = por %p67, %p68
      %s71 = sadd.s32 %s70, 1
      %p74 = scmp.eq.s32.totalorder %s15, 1
      %p75 = scmp.ne.s32.totalorder %s70, %s72
      %p76 = scmp.eq.s32.totalorder %s15, 0
      %p77 = por %p75, %p76
      %p78 = scmp.ne.s32.totalorder %s70, %s72
      %p79 = scmp.eq.s32.totalorder %s20, 1
      %p80 = por %p78, %p79
      %p81 = scmp.ne.s32.totalorder %s72, %s73
      %p82 = scmp.eq.s32.totalorder %s20, 0
      %p83 = por %p81, %p82
      %p84 = scmp.ne.s32.totalorder %s72, %s73
      %p85 = scmp.eq.s32.totalorder %s21, 1
      %p86 = por %p84, %p85
      %p88 = scmp.ne.s32.totalorder %s73, %s87
      %p89 = scmp.eq.s32.totalorder %s21, 0
      %p90 = por %p88, %p89
      %s92 = sadd.s32 %s91, 1
      %p95 = scmp.eq.s32.totalorder %s15, 1
      %p96 = scmp.ne.s32.totalorder %s91, %s93
      %p97 = scmp.eq.s32.totalorder %s15, 0
      %p98 = por %p96, %p97
      %p99 = scmp.ne.s32.totalorder %s91, %s93
      %p100 = scmp.eq.s32.totalorder %s20, 1
      %p101 = por %p99, %p100
      %p102 = scmp.ne.s32.totalorder %s93, %s94
      %p103 = scmp.eq.s32.totalorder %s20, 0
      %p104 = por %p102, %p103
      %p105 = scmp.ne.s32.totalorder %s93, %s94
      %p106 = scmp.eq.s32.totalorder %s21, 1
      %p107 = por %p105, %p106
      %p109 = scmp.ne.s32.totalorder %s94, %s108
      %p110 = scmp.eq.s32.totalorder %s21, 0
      %p111 = por %p109, %p110
      %s113 = sadd.s32 %s112, 1
      %p116 = scmp.eq.s32.totalorder %s15, 1
      %p117 = scmp.ne.s32.totalorder %s112, %s114
      %p118 = scmp.eq.s32.totalorder %s15, 0
      %p119 = por %p117, %p118
      %p120 = scmp.ne.s32.totalorder %s112, %s114
      %p121 = scmp.eq.s32.totalorder %s20, 1
      %p122 = por %p120, %p121
      %p123 = scmp.ne.s32.totalorder %s114, %s115
      %p124 = scmp.eq.s32.totalorder %s20, 0
      %p125 = por %p123, %p124
      %p126 = scmp.ne.s32.totalorder %s114, %s115
      %p127 = scmp.eq.s32.totalorder %s21, 1
      %p128 = por %p126, %p127
      %p130 = scmp.ne.s32.totalorder %s115, %s129
      %p131 = scmp.eq.s32.totalorder %s21, 0
      %p132 = por %p130, %p131
      %s134 = sadd.s32 %s133, 1
      %p137 = scmp.eq.s32.totalorder %s15, 1
      %p138 = scmp.ne.s32.totalorder %s133, %s135
      %p139 = scmp.eq.s32.totalorder %s15, 0
      %p140 = por %p138, %p139
      %p141 = scmp.ne.s32.totalorder %s133, %s135
      %p142 = scmp.eq.s32.totalorder %s20, 1
      %p143 = por %p141, %p142
      %p144 = scmp.ne.s32.totalorder %s135, %s136
      %p145 = scmp.eq.s32.totalorder %s20, 0
      %p146 = por %p144, %p145
      %p147 = scmp.ne.s32.totalorder %s135, %s136
      %p148 = scmp.eq.s32.totalorder %s21, 1
      %p149 = por %p147, %p148
      %p151 = scmp.ne.s32.totalorder %s136, %s150
      %p152 = scmp.eq.s32.totalorder %s21, 0
      %p153 = por %p151, %p152
      %s154 = ssub.s32 %s15, %s22
      %p155 = scmp.eq.s32.totalorder %s154, 0
      %s157 = sadd.s32 %s156, 1
      %s158 = scalar_select %p155, %s156, %s157
      %p161 = pneg %p155
      %p162 = scmp.eq.s32.totalorder %s15, 1
      %p163 = por %p161, %p162
      %p164 = scmp.ne.s32.totalorder %s156, %s159
      %p165 = scmp.eq.s32.totalorder %s15, 0
      %p166 = por %p164, %p165
      %p167 = scmp.ne.s32.totalorder %s156, %s159
      %p168 = scmp.eq.s32.totalorder %s20, 1
      %p169 = por %p167, %p168
      %p170 = scmp.ne.s32.totalorder %s159, %s160
      %p171 = scmp.eq.s32.totalorder %s20, 0
      %p172 = por %p170, %p171
      %p173 = scmp.ne.s32.totalorder %s159, %s160
      %p174 = scmp.eq.s32.totalorder %s21, 1
      %p175 = por %p173, %p174
      %p177 = scmp.ne.s32.totalorder %s160, %s176
      %p178 = scmp.eq.s32.totalorder %s21, 0
      %p179 = por %p177, %p178
      %p180 = scmp.le.s32.totalorder 1, %s15
      %p181 = scmp.lt.s32.totalorder %s15, 3
      %p182 = pnand %p180, %p181
      %p183 = pneg %p182
      // Predicated region
      $region9: #{tpu_custom_call.1} parent=5 // pred_check
        _
      $region10: #{tpu_custom_call.1} parent=5 // pred_check_branch
        %185 = sbr.rel (%p182) target = $region12
      $region11: #{tpu_custom_call.1} parent=5 // pred_region
        %s186 = ssub.s32 %s15, 1
        // Predicated region
        $region13: #{tpu_custom_call.1} parent=11 // pred_check
          %p187 = pneg %p62
        $region14: #{tpu_custom_call.1} parent=11 // pred_check_branch
          %189 = sbr.rel (%p187) target = $region16
        $region15: #{tpu_custom_call.1} parent=11 // pred_region
          _
        $region16: #{tpu_custom_call.1} parent=11 // pred_fallthru
          _
        // Predicated region
        $region17: #{tpu_custom_call.1} parent=11 // pred_check
          %p190 = pneg %p83
        $region18: #{tpu_custom_call.1} parent=11 // pred_check_branch
          %192 = sbr.rel (%p190) target = $region20
        $region19: #{tpu_custom_call.1} parent=11 // pred_region
          _
        $region20: #{tpu_custom_call.1} parent=11 // pred_fallthru
          _
        // Predicated region
        $region21: #{tpu_custom_call.1} parent=11 // pred_check
          %p193 = pneg %p104
        $region22: #{tpu_custom_call.1} parent=11 // pred_check_branch
          %195 = sbr.rel (%p193) target = $region24
        $region23: #{tpu_custom_call.1} parent=11 // pred_region
          _
        $region24: #{tpu_custom_call.1} parent=11 // pred_fallthru
          _
        // Predicated region
        $region25: #{tpu_custom_call.1} parent=11 // pred_check
          %p196 = pneg %p125
        $region26: #{tpu_custom_call.1} parent=11 // pred_check_branch
          %198 = sbr.rel (%p196) target = $region28
        $region27: #{tpu_custom_call.1} parent=11 // pred_region
          _
        $region28: #{tpu_custom_call.1} parent=11 // pred_fallthru
          _
        // Predicated region
        $region29: #{tpu_custom_call.1} parent=11 // pred_check
          %p199 = pneg %p146
        $region30: #{tpu_custom_call.1} parent=11 // pred_check_branch
          %201 = sbr.rel (%p199) target = $region32
        $region31: #{tpu_custom_call.1} parent=11 // pred_region
          _
        $region32: #{tpu_custom_call.1} parent=11 // pred_fallthru
          _
      $region12: #{tpu_custom_call.1} parent=5 // pred_fallthru
        _
      %p202 = scmp.lt.s32.totalorder %s15, 2
      // Predicated region
      $region33: #{tpu_custom_call.1} parent=5 // pred_check
        %p203 = pneg %p202
      $region34: #{tpu_custom_call.1} parent=5 // pred_check_branch
        %205 = sbr.rel (%p203) target = $region36
      $region35: #{tpu_custom_call.1} parent=5 // pred_region
        // Predicated region
        $region37: #{tpu_custom_call.1} parent=35 // pred_check
          %p206 = pneg %p35
        $region38: #{tpu_custom_call.1} parent=35 // pred_check_branch
          %208 = sbr.rel (%p206) target = $region40
        $region39: #{tpu_custom_call.1} parent=35 // pred_region
          %s209 = smul.u32 4, %s15
          %p210 = scmp.lt.s32.totalorder %s209, 7
          %s211 = scalar_select %p210, %s209, 7
          %s212 = smul.addr %s211, 2
          %s213 = smul.addr %s212, 8
          %s214 = scalar_lea.vmem %s0, %s213
          %s215 = smul.u32 4, %s15
        $region40: #{tpu_custom_call.1} parent=35 // pred_fallthru
          _
      $region36: #{tpu_custom_call.1} parent=5 // pred_fallthru
        _
      %p216 = scmp.le.s32.totalorder 1, %s15
      %p217 = scmp.lt.s32.totalorder %s15, 3
      %p218 = pnand %p216, %p217
      %p219 = pneg %p218
      // Predicated region
      $region41: #{tpu_custom_call.1} parent=5 // pred_check
        _
      $region42: #{tpu_custom_call.1} parent=5 // pred_check_branch
        %221 = sbr.rel (%p218) target = $region44
      $region43: #{tpu_custom_call.1} parent=5 // pred_region
        %s222 = ssub.s32 %s15, 1
        %s223 = smul.u32 4, %s20
        %p224 = scmp.lt.s32.totalorder %s223, 7
        %s225 = scalar_select %p224, %s223, 7
        %s226 = smul.addr %s225, 2
        %s227 = smul.addr %s226, 8
        %s228 = scalar_lea.vmem %s0, %s227
        %p229 = pneg %p41
        %p230 = pneg %p38
        %p231 = pneg %p62
        %p232 = pneg %p59
        %p233 = pneg %p83
        %p234 = pneg %p80
        %p235 = pneg %p104
        %p236 = pneg %p101
        %p237 = pneg %p125
        %p238 = pneg %p122
        %p239 = pneg %p146
        %p240 = pneg %p143
        %p241 = pneg %p172
        %p242 = pneg %p169
        %s243 = sand.u32 %s159, 1
        %s244 = scalar_lea.sflag [#allocation3], %s243
        %s245 = sand.u32 %s159, 1
        %s246 = smul.addr %s245, 4
        %s247 = scalar_lea.vmem [#allocation2], %s246
        %s248 = smul.u32 4, %s20
        %p249 = scmp.lt.s32.totalorder %s248, 7
        %s250 = scalar_select %p249, %s248, 7
        %s251 = smul.addr %s250, 2
        %s252 = smul.addr %s251, 8
        %s253 = scalar_lea.vmem %s0, %s252
        %s254 = smul.u32 4, %s20
        %v255 = vld [vmem:[%s253] sm:$0xff]
        %v256 = vld [vmem:[%s253 + $0x8] sm:$0xff]
        %v257 = vld [vmem:[%s253 + $0x10] sm:$0xff]
        %v258 = vld [vmem:[%s253 + $0x18] sm:$0xff]
        %v259 = vld [vmem:[%s253 + $0x20] sm:$0xff]
        %v260 = vld [vmem:[%s253 + $0x28] sm:$0xff]
        %v261 = vld [vmem:[%s253 + $0x30] sm:$0xff]
        %v262 = vld [vmem:[%s253 + $0x38] sm:$0xff]
        %v263 = vld [vmem:[%s1] sm:$0xff]
        %v264 = vld [vmem:[%s1 + $0x8] sm:$0xff]
        %v265 = vld [vmem:[%s1 + $0x10] sm:$0xff]
        %v266 = vld [vmem:[%s2] sm:$0x1]
        %vm275 = vcmask 1040384
        %v276 = vrot.slane %v255, 7
        %v277 = vrot.slane %v256, 7
        %v278 = vsel %vm275, %v276, %v277
        %v279 = vrot.slane %v257, 7
        %v280 = vrot.slane %v258, 7
        %v281 = vsel %vm275, %v279, %v280
        %v282 = vrot.slane %v259, 7
        %v283 = vrot.slane %v260, 7
        %v284 = vsel %vm275, %v282, %v283
        %v285 = vrot.slane %v261, 7
        %v286 = vrot.slane %v262, 7
        %v287 = vsel %vm275, %v285, %v286
        %v300 = vsel %vm275, 0.0, %v276
        %v301 = vsel %vm275, 0.0, %v279
        %v302 = vsel %vm275, 0.0, %v282
        %v303 = vsel %vm275, 0.0, %v285
        %v304 = vsel %vm275, %v277, 0.0
        %v305 = vsel %vm275, %v280, 0.0
        %v306 = vsel %vm275, %v283, 0.0
        %v307 = vsel %vm275, %v286, 0.0
        %vm316 = vcmask 1046528
        %v317 = vrot.slane %v300, 1
        %v318 = vrot.slane %v278, 1
        %v319 = vsel %vm316, %v317, %v318
        %v320 = vrot.slane %v304, 1
        %v321 = vsel %vm316, %v318, %v320
        %v322 = vrot.slane %v301, 1
        %v323 = vrot.slane %v281, 1
        %v324 = vsel %vm316, %v322, %v323
        %v325 = vrot.slane %v305, 1
        %v326 = vsel %vm316, %v323, %v325
        %v327 = vrot.slane %v302, 1
        %v328 = vrot.slane %v284, 1
        %v329 = vsel %vm316, %v327, %v328
        %v330 = vrot.slane %v306, 1
        %v331 = vsel %vm316, %v328, %v330
        %v332 = vrot.slane %v303, 1
        %v333 = vrot.slane %v287, 1
        %v334 = vsel %vm316, %v332, %v333
        %v335 = vrot.slane %v307, 1
        %v336 = vsel %vm316, %v333, %v335
        %337 = vrot.lane.b32.xlu0 %v319, 8
        %v338 = vpop.permute.xlu0 %337
        %339 = vrot.lane.b32.xlu0 %v321, 8
        %v340 = vpop.permute.xlu0 %339
        %341 = vrot.lane.b32.xlu0 %v324, 8
        %v342 = vpop.permute.xlu0 %341
        %343 = vrot.lane.b32.xlu0 %v326, 8
        %v344 = vpop.permute.xlu0 %343
        %345 = vrot.lane.b32.xlu0 %v329, 8
        %v346 = vpop.permute.xlu0 %345
        %347 = vrot.lane.b32.xlu0 %v331, 8
        %v348 = vpop.permute.xlu0 %347
        %349 = vrot.lane.b32.xlu0 %v334, 8
        %v350 = vpop.permute.xlu0 %349
        %351 = vrot.lane.b32.xlu0 %v336, 8
        %v352 = vpop.permute.xlu0 %351
        %vm361 = vcmask 1045504
        %v362 = vrot.slane %v300, 2
        %v363 = vrot.slane %v278, 2
        %v364 = vsel %vm361, %v362, %v363
        %v365 = vrot.slane %v304, 2
        %v366 = vsel %vm361, %v363, %v365
        %v367 = vrot.slane %v301, 2
        %v368 = vrot.slane %v281, 2
        %v369 = vsel %vm361, %v367, %v368
        %v370 = vrot.slane %v305, 2
        %v371 = vsel %vm361, %v368, %v370
        %v372 = vrot.slane %v302, 2
        %v373 = vrot.slane %v284, 2
        %v374 = vsel %vm361, %v372, %v373
        %v375 = vrot.slane %v306, 2
        %v376 = vsel %vm361, %v373, %v375
        %v377 = vrot.slane %v303, 2
        %v378 = vrot.slane %v287, 2
        %v379 = vsel %vm361, %v377, %v378
        %v380 = vrot.slane %v307, 2
        %v381 = vsel %vm361, %v378, %v380
        %382 = vrot.lane.b32.xlu0 %v364, 16
        %v383 = vpop.permute.xlu0 %382
        %384 = vrot.lane.b32.xlu0 %v366, 16
        %v385 = vpop.permute.xlu0 %384
        %386 = vrot.lane.b32.xlu0 %v369, 16
        %v387 = vpop.permute.xlu0 %386
        %388 = vrot.lane.b32.xlu0 %v371, 16
        %v389 = vpop.permute.xlu0 %388
        %390 = vrot.lane.b32.xlu0 %v374, 16
        %v391 = vpop.permute.xlu0 %390
        %392 = vrot.lane.b32.xlu0 %v376, 16
        %v393 = vpop.permute.xlu0 %392
        %394 = vrot.lane.b32.xlu0 %v379, 16
        %v395 = vpop.permute.xlu0 %394
        %396 = vrot.lane.b32.xlu0 %v381, 16
        %v397 = vpop.permute.xlu0 %396
        %vm406 = vcmask 64512
        %v407 = vsel %vm406, %v300, %v338
        %v408 = vsel %vm406, %v278, %v340
        %v409 = vsel %vm406, %v301, %v342
        %v410 = vsel %vm406, %v281, %v344
        %v411 = vsel %vm406, %v302, %v346
        %v412 = vsel %vm406, %v284, %v348
        %v413 = vsel %vm406, %v303, %v350
        %v414 = vsel %vm406, %v287, %v352
        %vm415 = vcmask 130048
        %v416 = vsel %vm415, %v407, %v383
        %v417 = vsel %vm415, %v408, %v385
        %v418 = vsel %vm415, %v409, %v387
        %v419 = vsel %vm415, %v410, %v389
        %v420 = vsel %vm415, %v411, %v391
        %v421 = vsel %vm415, %v412, %v393
        %v422 = vsel %vm415, %v413, %v395
        %v423 = vsel %vm415, %v414, %v397
        %v425 = vlaneseq
        %v426 = vshrl.u32 %v425, 7
        %v427 = vsub.s32 0, %v426
        %v428 = vrot.slane %v266, %v427
        %vm430 = vcmask 195584
        %v432 = vsel %vm430, %v416, 0
        %v435 = vsel %vm430, %v417, 0
        %v438 = vsel %vm430, %v418, 0
        %v441 = vsel %vm430, %v419, 0
        %v444 = vsel %vm430, %v420, 0
        %v447 = vsel %vm430, %v421, 0
        %v450 = vsel %vm430, %v422, 0
        %v453 = vsel %vm430, %v423, 0
        %455 = vmatprep.subr.mxu0 0.0
        %456 = vmatpush1.msra.mxu0 0.0
        %457 = vmatprep.subr.mxu0 0.0
        %458 = vmatpush1.msra.mxu0 0.0
        %459 = vmatprep.subr.mxu0 0.0
        %460 = vmatpush1.msra.mxu0 0.0
        %461 = vmatprep.subr.mxu0 0.0
        %462 = vmatpush1.msra.mxu0 0.0
        %463 = vmatprep.subr.mxu0 0.0
        %464 = vmatpush1.msra.mxu0 0.0
        %465 = vmatprep.subr.mxu0 0.0
        %466 = vmatpush1.msra.mxu0 0.0
        %467 = vmatprep.subr.mxu0 0.0
        %468 = vmatpush1.msra.mxu0 0.0
        %469 = vmatprep.subr.mxu0 0.0
        %470 = vmatpush1.msra.mxu0 0.0
        %471 = vmatprep.subr.mxu0 0.0
        %472 = vmatpush1.msra.mxu0 0.0
        %473 = vmatprep.subr.mxu0 0.0
        %474 = vmatpush1.msra.mxu0 0.0
        %475 = vmatprep.subr.mxu0 0.0
        %476 = vmatpush1.msra.mxu0 0.0
        %477 = vmatprep.subr.mxu0 0.0
        %478 = vmatpush1.msra.mxu0 0.0
        %479 = vmatprep.subr.mxu0 0.0
        %480 = vmatpush1.msra.mxu0 0.0
        %481 = vmatprep.subr.mxu0 0.0
        %482 = vmatpush1.msra.mxu0 %v265
        %483 = vmatprep.subr.mxu0 0.0
        %484 = vmatpush1.msra.mxu0 %v264
        %485 = vmatprep.subr.mxu0 0.0
        %486 = vmatpush1.msra.mxu0 %v263
        %487 = vmatprep.subr.mxu0 0.0
        %488 = vmatpush2.msra.mxu0 0.0
        %489 = vmatprep.subr.mxu0 0.0
        %490 = vmatpush2.msra.mxu0 0.0
        %491 = vmatprep.subr.mxu0 0.0
        %492 = vmatpush2.msra.mxu0 0.0
        %493 = vmatprep.subr.mxu0 0.0
        %494 = vmatpush2.msra.mxu0 0.0
        %495 = vmatprep.subr.mxu0 0.0
        %496 = vmatpush2.msra.mxu0 0.0
        %497 = vmatprep.subr.mxu0 0.0
        %498 = vmatpush2.msra.mxu0 0.0
        %499 = vmatprep.subr.mxu0 0.0
        %500 = vmatpush2.msra.mxu0 0.0
        %501 = vmatprep.subr.mxu0 0.0
        %502 = vmatpush2.msra.mxu0 0.0
        %503 = vmatprep.subr.mxu0 0.0
        %504 = vmatpush2.msra.mxu0 0.0
        %505 = vmatprep.subr.mxu0 0.0
        %506 = vmatpush2.msra.mxu0 0.0
        %507 = vmatprep.subr.mxu0 0.0
        %508 = vmatpush2.msra.mxu0 0.0
        %509 = vmatprep.subr.mxu0 0.0
        %510 = vmatpush2.msra.mxu0 0.0
        %511 = vmatprep.subr.mxu0 0.0
        %512 = vmatpush2.msra.mxu0 0.0
        %513 = vmatprep.subr.mxu0 0.0
        %514 = vmatpush2.msra.mxu0 0.0
        %515 = vmatprep.subr.mxu0 0.0
        %516 = vmatpush2.msra.mxu0 0.0
        %517 = vmatprep.subr.mxu0 0.0
        %518 = vmatpush2.msra.mxu0 0.0
        %519 = vmatprep.mubr.f32.mxu0 0.0
        %520 = vmatmul.mubr.f32.gmra.mxu0 %v432
        %v521 = vpop.f32.mrf.mxu0
        %v522 = vadd.f32 %v428, %v521
        %v523 = vpop.f32.mrf.mxu0
        %524 = vmatprep.mubr.f32.mxu0 0.0
        %525 = vmatmul.mubr.f32.gmra.mxu0 %v435
        %v526 = vpop.f32.mrf.mxu0
        %v527 = vadd.f32 %v428, %v526
        %v528 = vpop.f32.mrf.mxu0
        %529 = vmatprep.mubr.f32.mxu0 0.0
        %530 = vmatmul.mubr.f32.gmra.mxu0 %v438
        %v531 = vpop.f32.mrf.mxu0
        %v532 = vadd.f32 %v428, %v531
        %v533 = vpop.f32.mrf.mxu0
        %534 = vmatprep.mubr.f32.mxu0 0.0
        %535 = vmatmul.mubr.f32.gmra.mxu0 %v441
        %v536 = vpop.f32.mrf.mxu0
        %v537 = vadd.f32 %v428, %v536
        %v538 = vpop.f32.mrf.mxu0
        %539 = vmatprep.mubr.f32.mxu0 0.0
        %540 = vmatmul.mubr.f32.gmra.mxu0 %v444
        %v541 = vpop.f32.mrf.mxu0
        %v542 = vadd.f32 %v428, %v541
        %v543 = vpop.f32.mrf.mxu0
        %544 = vmatprep.mubr.f32.mxu0 0.0
        %545 = vmatmul.mubr.f32.gmra.mxu0 %v447
        %v546 = vpop.f32.mrf.mxu0
        %v547 = vadd.f32 %v428, %v546
        %v548 = vpop.f32.mrf.mxu0
        %549 = vmatprep.mubr.f32.mxu0 0.0
        %550 = vmatmul.mubr.f32.gmra.mxu0 %v450
        %v551 = vpop.f32.mrf.mxu0
        %v552 = vadd.f32 %v428, %v551
        %v553 = vpop.f32.mrf.mxu0
        %554 = vmatprep.mubr.f32.mxu0 0.0
        %555 = vmatmul.mubr.f32.gmra.mxu0 %v453
        %v556 = vpop.f32.mrf.mxu0
        %v557 = vadd.f32 %v428, %v556
        %v558 = vpop.f32.mrf.mxu0
        %559 = vdwg.mxu0
        %v560 = vmax.f32 %v522, 0.0
        %v561 = vmax.f32 %v527, 0.0
        %v562 = vmax.f32 %v532, 0.0
        %v563 = vmax.f32 %v537, 0.0
        %v564 = vmax.f32 %v542, 0.0
        %v565 = vmax.f32 %v547, 0.0
        %v566 = vmax.f32 %v552, 0.0
        %v567 = vmax.f32 %v557, 0.0
        %v568 = vld [vmem:[%s3] sm:$0xff]
        %v569 = vld [vmem:[%s3 + $0x8] sm:$0xff]
        %v570 = vld [vmem:[%s3 + $0x10] sm:$0xff]
        %v571 = vld [vmem:[%s3 + $0x18] sm:$0xff]
        %v572 = vld [vmem:[%s3 + $0x20] sm:$0xff]
        %v573 = vld [vmem:[%s3 + $0x28] sm:$0xff]
        %v574 = vld [vmem:[%s3 + $0x30] sm:$0xff]
        %v575 = vld [vmem:[%s3 + $0x38] sm:$0xff]
        %v576 = vld [vmem:[%s3 + $0x40] sm:$0xff]
        %v577 = vld [vmem:[%s3 + $0x48] sm:$0xff]
        %v578 = vld [vmem:[%s3 + $0x50] sm:$0xff]
        %v579 = vld [vmem:[%s3 + $0x58] sm:$0xff]
        %v580 = vld [vmem:[%s4] sm:$0x1]
        %v589 = vrot.slane %v560, 7
        %v590 = vrot.slane %v561, 7
        %v591 = vsel %vm275, %v589, %v590
        %v592 = vrot.slane %v562, 7
        %v593 = vrot.slane %v563, 7
        %v594 = vsel %vm275, %v592, %v593
        %v595 = vrot.slane %v564, 7
        %v596 = vrot.slane %v565, 7
        %v597 = vsel %vm275, %v595, %v596
        %v598 = vrot.slane %v566, 7
        %v599 = vrot.slane %v567, 7
        %v600 = vsel %vm275, %v598, %v599
        %v613 = vsel %vm275, 0.0, %v589
        %v614 = vsel %vm275, 0.0, %v592
        %v615 = vsel %vm275, 0.0, %v595
        %v616 = vsel %vm275, 0.0, %v598
        %v617 = vsel %vm275, %v590, 0.0
        %v618 = vsel %vm275, %v593, 0.0
        %v619 = vsel %vm275, %v596, 0.0
        %v620 = vsel %vm275, %v599, 0.0
        %v629 = vrot.slane %v613, 1
        %v630 = vrot.slane %v591, 1
        %v631 = vsel %vm316, %v629, %v630
        %v632 = vrot.slane %v617, 1
        %v633 = vsel %vm316, %v630, %v632
        %v634 = vrot.slane %v614, 1
        %v635 = vrot.slane %v594, 1
        %v636 = vsel %vm316, %v634, %v635
        %v637 = vrot.slane %v618, 1
        %v638 = vsel %vm316, %v635, %v637
        %v639 = vrot.slane %v615, 1
        %v640 = vrot.slane %v597, 1
        %v641 = vsel %vm316, %v639, %v640
        %v642 = vrot.slane %v619, 1
        %v643 = vsel %vm316, %v640, %v642
        %v644 = vrot.slane %v616, 1
        %v645 = vrot.slane %v600, 1
        %v646 = vsel %vm316, %v644, %v645
        %v647 = vrot.slane %v620, 1
        %v648 = vsel %vm316, %v645, %v647
        %649 = vrot.lane.b32.xlu0 %v631, 32
        %v650 = vpop.permute.xlu0 %649
        %651 = vrot.lane.b32.xlu0 %v633, 32
        %v652 = vpop.permute.xlu0 %651
        %653 = vrot.lane.b32.xlu0 %v636, 32
        %v654 = vpop.permute.xlu0 %653
        %655 = vrot.lane.b32.xlu0 %v638, 32
        %v656 = vpop.permute.xlu0 %655
        %657 = vrot.lane.b32.xlu0 %v641, 32
        %v658 = vpop.permute.xlu0 %657
        %659 = vrot.lane.b32.xlu0 %v643, 32
        %v660 = vpop.permute.xlu0 %659
        %661 = vrot.lane.b32.xlu0 %v646, 32
        %v662 = vpop.permute.xlu0 %661
        %663 = vrot.lane.b32.xlu0 %v648, 32
        %v664 = vpop.permute.xlu0 %663
        %v673 = vrot.slane %v613, 2
        %v674 = vrot.slane %v591, 2
        %v675 = vsel %vm361, %v673, %v674
        %v676 = vrot.slane %v617, 2
        %v677 = vsel %vm361, %v674, %v676
        %v678 = vrot.slane %v614, 2
        %v679 = vrot.slane %v594, 2
        %v680 = vsel %vm361, %v678, %v679
        %v681 = vrot.slane %v618, 2
        %v682 = vsel %vm361, %v679, %v681
        %v683 = vrot.slane %v615, 2
        %v684 = vrot.slane %v597, 2
        %v685 = vsel %vm361, %v683, %v684
        %v686 = vrot.slane %v619, 2
        %v687 = vsel %vm361, %v684, %v686
        %v688 = vrot.slane %v616, 2
        %v689 = vrot.slane %v600, 2
        %v690 = vsel %vm361, %v688, %v689
        %v691 = vrot.slane %v620, 2
        %v692 = vsel %vm361, %v689, %v691
        %693 = vrot.lane.b32.xlu0 %v675, 64
        %v694 = vpop.permute.xlu0 %693
        %695 = vrot.lane.b32.xlu0 %v677, 64
        %v696 = vpop.permute.xlu0 %695
        %697 = vrot.lane.b32.xlu0 %v680, 64
        %v698 = vpop.permute.xlu0 %697
        %699 = vrot.lane.b32.xlu0 %v682, 64
        %v700 = vpop.permute.xlu0 %699
        %701 = vrot.lane.b32.xlu0 %v685, 64
        %v702 = vpop.permute.xlu0 %701
        %703 = vrot.lane.b32.xlu0 %v687, 64
        %v704 = vpop.permute.xlu0 %703
        %705 = vrot.lane.b32.xlu0 %v690, 64
        %v706 = vpop.permute.xlu0 %705
        %707 = vrot.lane.b32.xlu0 %v692, 64
        %v708 = vpop.permute.xlu0 %707
        %vm717 = vcmask 261120
        %v718 = vsel %vm717, %v613, %v650
        %v719 = vsel %vm717, %v591, %v652
        %v720 = vsel %vm717, %v614, %v654
        %v721 = vsel %vm717, %v594, %v656
        %v722 = vsel %vm717, %v615, %v658
        %v723 = vsel %vm717, %v597, %v660
        %v724 = vsel %vm717, %v616, %v662
        %v725 = vsel %vm717, %v600, %v664
        %vm726 = vcmask 523264
        %v727 = vsel %vm726, %v718, %v694
        %v728 = vsel %vm726, %v719, %v696
        %v729 = vsel %vm726, %v720, %v698
        %v730 = vsel %vm726, %v721, %v700
        %v731 = vsel %vm726, %v722, %v702
        %v732 = vsel %vm726, %v723, %v704
        %v733 = vsel %vm726, %v724, %v706
        %v734 = vsel %vm726, %v725, %v708
        %v736 = vlaneseq
        %v737 = vshrl.u32 %v736, 7
        %v738 = vsub.s32 0, %v737
        %v739 = vrot.slane %v580, %v738
        %vm741 = vcmask 785408
        %v743 = vsel %vm741, %v727, 0
        %v746 = vsel %vm741, %v728, 0
        %v749 = vsel %vm741, %v729, 0
        %v752 = vsel %vm741, %v730, 0
        %v755 = vsel %vm741, %v731, 0
        %v758 = vsel %vm741, %v732, 0
        %v761 = vsel %vm741, %v733, 0
        %v764 = vsel %vm741, %v734, 0
        %766 = vmatprep.subr.mxu0 0.0
        %767 = vmatpush1.msra.mxu0 0.0
        %768 = vmatprep.subr.mxu0 0.0
        %769 = vmatpush1.msra.mxu0 0.0
        %770 = vmatprep.subr.mxu0 0.0
        %771 = vmatpush1.msra.mxu0 0.0
        %772 = vmatprep.subr.mxu0 0.0
        %773 = vmatpush1.msra.mxu0 0.0
        %774 = vmatprep.subr.mxu0 0.0
        %775 = vmatpush1.msra.mxu0 %v579
        %776 = vmatprep.subr.mxu0 0.0
        %777 = vmatpush1.msra.mxu0 %v578
        %778 = vmatprep.subr.mxu0 0.0
        %779 = vmatpush1.msra.mxu0 %v577
        %780 = vmatprep.subr.mxu0 0.0
        %781 = vmatpush1.msra.mxu0 %v576
        %782 = vmatprep.subr.mxu0 0.0
        %783 = vmatpush1.msra.mxu0 %v575
        %784 = vmatprep.subr.mxu0 0.0
        %785 = vmatpush1.msra.mxu0 %v574
        %786 = vmatprep.subr.mxu0 0.0
        %787 = vmatpush1.msra.mxu0 %v573
        %788 = vmatprep.subr.mxu0 0.0
        %789 = vmatpush1.msra.mxu0 %v572
        %790 = vmatprep.subr.mxu0 0.0
        %791 = vmatpush1.msra.mxu0 %v571
        %792 = vmatprep.subr.mxu0 0.0
        %793 = vmatpush1.msra.mxu0 %v570
        %794 = vmatprep.subr.mxu0 0.0
        %795 = vmatpush1.msra.mxu0 %v569
        %796 = vmatprep.subr.mxu0 0.0
        %797 = vmatpush1.msra.mxu0 %v568
        %798 = vmatprep.subr.mxu0 0.0
        %799 = vmatpush2.msra.mxu0 0.0
        %800 = vmatprep.subr.mxu0 0.0
        %801 = vmatpush2.msra.mxu0 0.0
        %802 = vmatprep.subr.mxu0 0.0
        %803 = vmatpush2.msra.mxu0 0.0
        %804 = vmatprep.subr.mxu0 0.0
        %805 = vmatpush2.msra.mxu0 0.0
        %806 = vmatprep.subr.mxu0 0.0
        %807 = vmatpush2.msra.mxu0 0.0
        %808 = vmatprep.subr.mxu0 0.0
        %809 = vmatpush2.msra.mxu0 0.0
        %810 = vmatprep.subr.mxu0 0.0
        %811 = vmatpush2.msra.mxu0 0.0
        %812 = vmatprep.subr.mxu0 0.0
        %813 = vmatpush2.msra.mxu0 0.0
        %814 = vmatprep.subr.mxu0 0.0
        %815 = vmatpush2.msra.mxu0 0.0
        %816 = vmatprep.subr.mxu0 0.0
        %817 = vmatpush2.msra.mxu0 0.0
        %818 = vmatprep.subr.mxu0 0.0
        %819 = vmatpush2.msra.mxu0 0.0
        %820 = vmatprep.subr.mxu0 0.0
        %821 = vmatpush2.msra.mxu0 0.0
        %822 = vmatprep.subr.mxu0 0.0
        %823 = vmatpush2.msra.mxu0 0.0
        %824 = vmatprep.subr.mxu0 0.0
        %825 = vmatpush2.msra.mxu0 0.0
        %826 = vmatprep.subr.mxu0 0.0
        %827 = vmatpush2.msra.mxu0 0.0
        %828 = vmatprep.subr.mxu0 0.0
        %829 = vmatpush2.msra.mxu0 0.0
        %830 = vmatprep.mubr.f32.mxu0 0.0
        %831 = vmatmul.mubr.f32.gmra.mxu0 %v743
        %v832 = vpop.f32.mrf.mxu0
        %v833 = vadd.f32 %v739, %v832
        %v834 = vpop.f32.mrf.mxu0
        %835 = vmatprep.mubr.f32.mxu0 0.0
        %836 = vmatmul.mubr.f32.gmra.mxu0 %v746
        %v837 = vpop.f32.mrf.mxu0
        %v838 = vadd.f32 %v739, %v837
        %v839 = vpop.f32.mrf.mxu0
        %840 = vmatprep.mubr.f32.mxu0 0.0
        %841 = vmatmul.mubr.f32.gmra.mxu0 %v749
        %v842 = vpop.f32.mrf.mxu0
        %v843 = vadd.f32 %v739, %v842
        %v844 = vpop.f32.mrf.mxu0
        %845 = vmatprep.mubr.f32.mxu0 0.0
        %846 = vmatmul.mubr.f32.gmra.mxu0 %v752
        %v847 = vpop.f32.mrf.mxu0
        %v848 = vadd.f32 %v739, %v847
        %v849 = vpop.f32.mrf.mxu0
        %850 = vmatprep.mubr.f32.mxu0 0.0
        %851 = vmatmul.mubr.f32.gmra.mxu0 %v755
        %v852 = vpop.f32.mrf.mxu0
        %v853 = vadd.f32 %v739, %v852
        %v854 = vpop.f32.mrf.mxu0
        %855 = vmatprep.mubr.f32.mxu0 0.0
        %856 = vmatmul.mubr.f32.gmra.mxu0 %v758
        %v857 = vpop.f32.mrf.mxu0
        %v858 = vadd.f32 %v739, %v857
        %v859 = vpop.f32.mrf.mxu0
        %860 = vmatprep.mubr.f32.mxu0 0.0
        %861 = vmatmul.mubr.f32.gmra.mxu0 %v761
        %v862 = vpop.f32.mrf.mxu0
        %v863 = vadd.f32 %v739, %v862
        %v864 = vpop.f32.mrf.mxu0
        %865 = vmatprep.mubr.f32.mxu0 0.0
        %866 = vmatmul.mubr.f32.gmra.mxu0 %v764
        %v867 = vpop.f32.mrf.mxu0
        %v868 = vadd.f32 %v739, %v867
        %v869 = vpop.f32.mrf.mxu0
        %870 = vdwg.mxu0
        %v871 = vmax.f32 %v833, 0.0
        %v872 = vmax.f32 %v838, 0.0
        %v873 = vmax.f32 %v843, 0.0
        %v874 = vmax.f32 %v848, 0.0
        %v875 = vmax.f32 %v853, 0.0
        %v876 = vmax.f32 %v858, 0.0
        %v877 = vmax.f32 %v863, 0.0
        %v878 = vmax.f32 %v868, 0.0
        %s879 = scalar_lea.vmem %s3, 96
        %v880 = vld [vmem:[%s879] sm:$0xff]
        %v881 = vld [vmem:[%s879 + $0x8] sm:$0xff]
        %v882 = vld [vmem:[%s879 + $0x10] sm:$0xff]
        %v883 = vld [vmem:[%s879 + $0x18] sm:$0xff]
        %v884 = vld [vmem:[%s879 + $0x20] sm:$0xff]
        %v885 = vld [vmem:[%s879 + $0x28] sm:$0xff]
        %v886 = vld [vmem:[%s879 + $0x30] sm:$0xff]
        %v887 = vld [vmem:[%s879 + $0x38] sm:$0xff]
        %v888 = vld [vmem:[%s879 + $0x40] sm:$0xff]
        %v889 = vld [vmem:[%s879 + $0x48] sm:$0xff]
        %v890 = vld [vmem:[%s879 + $0x50] sm:$0xff]
        %v891 = vld [vmem:[%s879 + $0x58] sm:$0xff]
        %s892 = scalar_lea.vmem %s4, 1
        %v893 = vld [vmem:[%s892] sm:$0x1]
        %v902 = vrot.slane %v871, 7
        %v903 = vrot.slane %v872, 7
        %v904 = vsel %vm275, %v902, %v903
        %v905 = vrot.slane %v873, 7
        %v906 = vrot.slane %v874, 7
        %v907 = vsel %vm275, %v905, %v906
        %v908 = vrot.slane %v875, 7
        %v909 = vrot.slane %v876, 7
        %v910 = vsel %vm275, %v908, %v909
        %v911 = vrot.slane %v877, 7
        %v912 = vrot.slane %v878, 7
        %v913 = vsel %vm275, %v911, %v912
        %v926 = vsel %vm275, 0.0, %v902
        %v927 = vsel %vm275, 0.0, %v905
        %v928 = vsel %vm275, 0.0, %v908
        %v929 = vsel %vm275, 0.0, %v911
        %v930 = vsel %vm275, %v903, 0.0
        %v931 = vsel %vm275, %v906, 0.0
        %v932 = vsel %vm275, %v909, 0.0
        %v933 = vsel %vm275, %v912, 0.0
        %v942 = vrot.slane %v926, 1
        %v943 = vrot.slane %v904, 1
        %v944 = vsel %vm316, %v942, %v943
        %v945 = vrot.slane %v930, 1
        %v946 = vsel %vm316, %v943, %v945
        %v947 = vrot.slane %v927, 1
        %v948 = vrot.slane %v907, 1
        %v949 = vsel %vm316, %v947, %v948
        %v950 = vrot.slane %v931, 1
        %v951 = vsel %vm316, %v948, %v950
        %v952 = vrot.slane %v928, 1
        %v953 = vrot.slane %v910, 1
        %v954 = vsel %vm316, %v952, %v953
        %v955 = vrot.slane %v932, 1
        %v956 = vsel %vm316, %v953, %v955
        %v957 = vrot.slane %v929, 1
        %v958 = vrot.slane %v913, 1
        %v959 = vsel %vm316, %v957, %v958
        %v960 = vrot.slane %v933, 1
        %v961 = vsel %vm316, %v958, %v960
        %962 = vrot.lane.b32.xlu0 %v944, 32
        %v963 = vpop.permute.xlu0 %962
        %964 = vrot.lane.b32.xlu0 %v946, 32
        %v965 = vpop.permute.xlu0 %964
        %966 = vrot.lane.b32.xlu0 %v949, 32
        %v967 = vpop.permute.xlu0 %966
        %968 = vrot.lane.b32.xlu0 %v951, 32
        %v969 = vpop.permute.xlu0 %968
        %970 = vrot.lane.b32.xlu0 %v954, 32
        %v971 = vpop.permute.xlu0 %970
        %972 = vrot.lane.b32.xlu0 %v956, 32
        %v973 = vpop.permute.xlu0 %972
        %974 = vrot.lane.b32.xlu0 %v959, 32
        %v975 = vpop.permute.xlu0 %974
        %976 = vrot.lane.b32.xlu0 %v961, 32
        %v977 = vpop.permute.xlu0 %976
        %v986 = vrot.slane %v926, 2
        %v987 = vrot.slane %v904, 2
        %v988 = vsel %vm361, %v986, %v987
        %v989 = vrot.slane %v930, 2
        %v990 = vsel %vm361, %v987, %v989
        %v991 = vrot.slane %v927, 2
        %v992 = vrot.slane %v907, 2
        %v993 = vsel %vm361, %v991, %v992
        %v994 = vrot.slane %v931, 2
        %v995 = vsel %vm361, %v992, %v994
        %v996 = vrot.slane %v928, 2
        %v997 = vrot.slane %v910, 2
        %v998 = vsel %vm361, %v996, %v997
        %v999 = vrot.slane %v932, 2
        %v1000 = vsel %vm361, %v997, %v999
        %v1001 = vrot.slane %v929, 2
        %v1002 = vrot.slane %v913, 2
        %v1003 = vsel %vm361, %v1001, %v1002
        %v1004 = vrot.slane %v933, 2
        %v1005 = vsel %vm361, %v1002, %v1004
        %1006 = vrot.lane.b32.xlu0 %v988, 64
        %v1007 = vpop.permute.xlu0 %1006
        %1008 = vrot.lane.b32.xlu0 %v990, 64
        %v1009 = vpop.permute.xlu0 %1008
        %1010 = vrot.lane.b32.xlu0 %v993, 64
        %v1011 = vpop.permute.xlu0 %1010
        %1012 = vrot.lane.b32.xlu0 %v995, 64
        %v1013 = vpop.permute.xlu0 %1012
        %1014 = vrot.lane.b32.xlu0 %v998, 64
        %v1015 = vpop.permute.xlu0 %1014
        %1016 = vrot.lane.b32.xlu0 %v1000, 64
        %v1017 = vpop.permute.xlu0 %1016
        %1018 = vrot.lane.b32.xlu0 %v1003, 64
        %v1019 = vpop.permute.xlu0 %1018
        %1020 = vrot.lane.b32.xlu0 %v1005, 64
        %v1021 = vpop.permute.xlu0 %1020
        %v1030 = vsel %vm717, %v926, %v963
        %v1031 = vsel %vm717, %v904, %v965
        %v1032 = vsel %vm717, %v927, %v967
        %v1033 = vsel %vm717, %v907, %v969
        %v1034 = vsel %vm717, %v928, %v971
        %v1035 = vsel %vm717, %v910, %v973
        %v1036 = vsel %vm717, %v929, %v975
        %v1037 = vsel %vm717, %v913, %v977
        %v1038 = vsel %vm726, %v1030, %v1007
        %v1039 = vsel %vm726, %v1031, %v1009
        %v1040 = vsel %vm726, %v1032, %v1011
        %v1041 = vsel %vm726, %v1033, %v1013
        %v1042 = vsel %vm726, %v1034, %v1015
        %v1043 = vsel %vm726, %v1035, %v1017
        %v1044 = vsel %vm726, %v1036, %v1019
        %v1045 = vsel %vm726, %v1037, %v1021
        %v1047 = vlaneseq
        %v1048 = vshrl.u32 %v1047, 7
        %v1049 = vsub.s32 0, %v1048
        %v1050 = vrot.slane %v893, %v1049
        %v1053 = vsel %vm741, %v1038, 0
        %v1056 = vsel %vm741, %v1039, 0
        %v1059 = vsel %vm741, %v1040, 0
        %v1062 = vsel %vm741, %v1041, 0
        %v1065 = vsel %vm741, %v1042, 0
        %v1068 = vsel %vm741, %v1043, 0
        %v1071 = vsel %vm741, %v1044, 0
        %v1074 = vsel %vm741, %v1045, 0
        %1076 = vmatprep.subr.mxu0 0.0
        %1077 = vmatpush1.msra.mxu0 0.0
        %1078 = vmatprep.subr.mxu0 0.0
        %1079 = vmatpush1.msra.mxu0 0.0
        %1080 = vmatprep.subr.mxu0 0.0
        %1081 = vmatpush1.msra.mxu0 0.0
        %1082 = vmatprep.subr.mxu0 0.0
        %1083 = vmatpush1.msra.mxu0 0.0
        %1084 = vmatprep.subr.mxu0 0.0
        %1085 = vmatpush1.msra.mxu0 %v891
        %1086 = vmatprep.subr.mxu0 0.0
        %1087 = vmatpush1.msra.mxu0 %v890
        %1088 = vmatprep.subr.mxu0 0.0
        %1089 = vmatpush1.msra.mxu0 %v889
        %1090 = vmatprep.subr.mxu0 0.0
        %1091 = vmatpush1.msra.mxu0 %v888
        %1092 = vmatprep.subr.mxu0 0.0
        %1093 = vmatpush1.msra.mxu0 %v887
        %1094 = vmatprep.subr.mxu0 0.0
        %1095 = vmatpush1.msra.mxu0 %v886
        %1096 = vmatprep.subr.mxu0 0.0
        %1097 = vmatpush1.msra.mxu0 %v885
        %1098 = vmatprep.subr.mxu0 0.0
        %1099 = vmatpush1.msra.mxu0 %v884
        %1100 = vmatprep.subr.mxu0 0.0
        %1101 = vmatpush1.msra.mxu0 %v883
        %1102 = vmatprep.subr.mxu0 0.0
        %1103 = vmatpush1.msra.mxu0 %v882
        %1104 = vmatprep.subr.mxu0 0.0
        %1105 = vmatpush1.msra.mxu0 %v881
        %1106 = vmatprep.subr.mxu0 0.0
        %1107 = vmatpush1.msra.mxu0 %v880
        %1108 = vmatprep.subr.mxu0 0.0
        %1109 = vmatpush2.msra.mxu0 0.0
        %1110 = vmatprep.subr.mxu0 0.0
        %1111 = vmatpush2.msra.mxu0 0.0
        %1112 = vmatprep.subr.mxu0 0.0
        %1113 = vmatpush2.msra.mxu0 0.0
        %1114 = vmatprep.subr.mxu0 0.0
        %1115 = vmatpush2.msra.mxu0 0.0
        %1116 = vmatprep.subr.mxu0 0.0
        %1117 = vmatpush2.msra.mxu0 0.0
        %1118 = vmatprep.subr.mxu0 0.0
        %1119 = vmatpush2.msra.mxu0 0.0
        %1120 = vmatprep.subr.mxu0 0.0
        %1121 = vmatpush2.msra.mxu0 0.0
        %1122 = vmatprep.subr.mxu0 0.0
        %1123 = vmatpush2.msra.mxu0 0.0
        %1124 = vmatprep.subr.mxu0 0.0
        %1125 = vmatpush2.msra.mxu0 0.0
        %1126 = vmatprep.subr.mxu0 0.0
        %1127 = vmatpush2.msra.mxu0 0.0
        %1128 = vmatprep.subr.mxu0 0.0
        %1129 = vmatpush2.msra.mxu0 0.0
        %1130 = vmatprep.subr.mxu0 0.0
        %1131 = vmatpush2.msra.mxu0 0.0
        %1132 = vmatprep.subr.mxu0 0.0
        %1133 = vmatpush2.msra.mxu0 0.0
        %1134 = vmatprep.subr.mxu0 0.0
        %1135 = vmatpush2.msra.mxu0 0.0
        %1136 = vmatprep.subr.mxu0 0.0
        %1137 = vmatpush2.msra.mxu0 0.0
        %1138 = vmatprep.subr.mxu0 0.0
        %1139 = vmatpush2.msra.mxu0 0.0
        %1140 = vmatprep.mubr.f32.mxu0 0.0
        %1141 = vmatmul.mubr.f32.gmra.mxu0 %v1053
        %v1142 = vpop.f32.mrf.mxu0
        %v1143 = vadd.f32 %v1050, %v1142
        %v1144 = vpop.f32.mrf.mxu0
        %1145 = vmatprep.mubr.f32.mxu0 0.0
        %1146 = vmatmul.mubr.f32.gmra.mxu0 %v1056
        %v1147 = vpop.f32.mrf.mxu0
        %v1148 = vadd.f32 %v1050, %v1147
        %v1149 = vpop.f32.mrf.mxu0
        %1150 = vmatprep.mubr.f32.mxu0 0.0
        %1151 = vmatmul.mubr.f32.gmra.mxu0 %v1059
        %v1152 = vpop.f32.mrf.mxu0
        %v1153 = vadd.f32 %v1050, %v1152
        %v1154 = vpop.f32.mrf.mxu0
        %1155 = vmatprep.mubr.f32.mxu0 0.0
        %1156 = vmatmul.mubr.f32.gmra.mxu0 %v1062
        %v1157 = vpop.f32.mrf.mxu0
        %v1158 = vadd.f32 %v1050, %v1157
        %v1159 = vpop.f32.mrf.mxu0
        %1160 = vmatprep.mubr.f32.mxu0 0.0
        %1161 = vmatmul.mubr.f32.gmra.mxu0 %v1065
        %v1162 = vpop.f32.mrf.mxu0
        %v1163 = vadd.f32 %v1050, %v1162
        %v1164 = vpop.f32.mrf.mxu0
        %1165 = vmatprep.mubr.f32.mxu0 0.0
        %1166 = vmatmul.mubr.f32.gmra.mxu0 %v1068
        %v1167 = vpop.f32.mrf.mxu0
        %v1168 = vadd.f32 %v1050, %v1167
        %v1169 = vpop.f32.mrf.mxu0
        %1170 = vmatprep.mubr.f32.mxu0 0.0
        %1171 = vmatmul.mubr.f32.gmra.mxu0 %v1071
        %v1172 = vpop.f32.mrf.mxu0
        %v1173 = vadd.f32 %v1050, %v1172
        %v1174 = vpop.f32.mrf.mxu0
        %1175 = vmatprep.mubr.f32.mxu0 0.0
        %1176 = vmatmul.mubr.f32.gmra.mxu0 %v1074
        %v1177 = vpop.f32.mrf.mxu0
        %v1178 = vadd.f32 %v1050, %v1177
        %v1179 = vpop.f32.mrf.mxu0
        %1180 = vdwg.mxu0
        %v1181 = vmax.f32 %v1143, 0.0
        %v1182 = vmax.f32 %v1148, 0.0
        %v1183 = vmax.f32 %v1153, 0.0
        %v1184 = vmax.f32 %v1158, 0.0
        %v1185 = vmax.f32 %v1163, 0.0
        %v1186 = vmax.f32 %v1168, 0.0
        %v1187 = vmax.f32 %v1173, 0.0
        %v1188 = vmax.f32 %v1178, 0.0
        %v1189 = vld [vmem:[%s5] sm:$0xff]
        %v1190 = vld [vmem:[%s5 + $0x8] sm:$0xff]
        %v1191 = vld [vmem:[%s5 + $0x10] sm:$0xff]
        %v1192 = vld [vmem:[%s5 + $0x18] sm:$0xff]
        %v1194 = vsel %vm717, %v1181, 0
        %v1197 = vsel %vm717, %v1182, 0
        %v1200 = vsel %vm717, %v1183, 0
        %v1203 = vsel %vm717, %v1184, 0
        %v1206 = vsel %vm717, %v1185, 0
        %v1209 = vsel %vm717, %v1186, 0
        %v1212 = vsel %vm717, %v1187, 0
        %v1215 = vsel %vm717, %v1188, 0
        %1217 = vmatprep.subr.mxu0 0.0
        %1218 = vmatpush1.msra.mxu0 0.0
        %1219 = vmatprep.subr.mxu0 0.0
        %1220 = vmatpush1.msra.mxu0 0.0
        %1221 = vmatprep.subr.mxu0 0.0
        %1222 = vmatpush1.msra.mxu0 0.0
        %1223 = vmatprep.subr.mxu0 0.0
        %1224 = vmatpush1.msra.mxu0 0.0
        %1225 = vmatprep.subr.mxu0 0.0
        %1226 = vmatpush1.msra.mxu0 0.0
        %1227 = vmatprep.subr.mxu0 0.0
        %1228 = vmatpush1.msra.mxu0 0.0
        %1229 = vmatprep.subr.mxu0 0.0
        %1230 = vmatpush1.msra.mxu0 0.0
        %1231 = vmatprep.subr.mxu0 0.0
        %1232 = vmatpush1.msra.mxu0 0.0
        %1233 = vmatprep.subr.mxu0 0.0
        %1234 = vmatpush1.msra.mxu0 0.0
        %1235 = vmatprep.subr.mxu0 0.0
        %1236 = vmatpush1.msra.mxu0 0.0
        %1237 = vmatprep.subr.mxu0 0.0
        %1238 = vmatpush1.msra.mxu0 0.0
        %1239 = vmatprep.subr.mxu0 0.0
        %1240 = vmatpush1.msra.mxu0 0.0
        %1241 = vmatprep.subr.mxu0 0.0
        %1242 = vmatpush1.msra.mxu0 %v1192
        %1243 = vmatprep.subr.mxu0 0.0
        %1244 = vmatpush1.msra.mxu0 %v1191
        %1245 = vmatprep.subr.mxu0 0.0
        %1246 = vmatpush1.msra.mxu0 %v1190
        %1247 = vmatprep.subr.mxu0 0.0
        %1248 = vmatpush1.msra.mxu0 %v1189
        %1249 = vmatprep.subr.mxu0 0.0
        %1250 = vmatpush2.msra.mxu0 0.0
        %1251 = vmatprep.subr.mxu0 0.0
        %1252 = vmatpush2.msra.mxu0 0.0
        %1253 = vmatprep.subr.mxu0 0.0
        %1254 = vmatpush2.msra.mxu0 0.0
        %1255 = vmatprep.subr.mxu0 0.0
        %1256 = vmatpush2.msra.mxu0 0.0
        %1257 = vmatprep.subr.mxu0 0.0
        %1258 = vmatpush2.msra.mxu0 0.0
        %1259 = vmatprep.subr.mxu0 0.0
        %1260 = vmatpush2.msra.mxu0 0.0
        %1261 = vmatprep.subr.mxu0 0.0
        %1262 = vmatpush2.msra.mxu0 0.0
        %1263 = vmatprep.subr.mxu0 0.0
        %1264 = vmatpush2.msra.mxu0 0.0
        %1265 = vmatprep.subr.mxu0 0.0
        %1266 = vmatpush2.msra.mxu0 0.0
        %1267 = vmatprep.subr.mxu0 0.0
        %1268 = vmatpush2.msra.mxu0 0.0
        %1269 = vmatprep.subr.mxu0 0.0
        %1270 = vmatpush2.msra.mxu0 0.0
        %1271 = vmatprep.subr.mxu0 0.0
        %1272 = vmatpush2.msra.mxu0 0.0
        %1273 = vmatprep.subr.mxu0 0.0
        %1274 = vmatpush2.msra.mxu0 0.0
        %1275 = vmatprep.subr.mxu0 0.0
        %1276 = vmatpush2.msra.mxu0 0.0
        %1277 = vmatprep.subr.mxu0 0.0
        %1278 = vmatpush2.msra.mxu0 0.0
        %1279 = vmatprep.subr.mxu0 0.0
        %1280 = vmatpush2.msra.mxu0 0.0
        %1281 = vmatprep.mubr.f32.mxu0 0.0
        %1282 = vmatmul.mubr.f32.gmra.mxu0 %v1194
        %v1283 = vpop.f32.mrf.mxu0
        %v1284 = vadd.f32 0.0, %v1283
        %v1285 = vpop.f32.mrf.mxu0
        %1286 = vmatprep.mubr.f32.mxu0 0.0
        %1287 = vmatmul.mubr.f32.gmra.mxu0 %v1197
        %v1288 = vpop.f32.mrf.mxu0
        %v1289 = vadd.f32 0.0, %v1288
        %v1290 = vpop.f32.mrf.mxu0
        %1291 = vmatprep.mubr.f32.mxu0 0.0
        %1292 = vmatmul.mubr.f32.gmra.mxu0 %v1200
        %v1293 = vpop.f32.mrf.mxu0
        %v1294 = vadd.f32 0.0, %v1293
        %v1295 = vpop.f32.mrf.mxu0
        %1296 = vmatprep.mubr.f32.mxu0 0.0
        %1297 = vmatmul.mubr.f32.gmra.mxu0 %v1203
        %v1298 = vpop.f32.mrf.mxu0
        %v1299 = vadd.f32 0.0, %v1298
        %v1300 = vpop.f32.mrf.mxu0
        %1301 = vmatprep.mubr.f32.mxu0 0.0
        %1302 = vmatmul.mubr.f32.gmra.mxu0 %v1206
        %v1303 = vpop.f32.mrf.mxu0
        %v1304 = vadd.f32 0.0, %v1303
        %v1305 = vpop.f32.mrf.mxu0
        %1306 = vmatprep.mubr.f32.mxu0 0.0
        %1307 = vmatmul.mubr.f32.gmra.mxu0 %v1209
        %v1308 = vpop.f32.mrf.mxu0
        %v1309 = vadd.f32 0.0, %v1308
        %v1310 = vpop.f32.mrf.mxu0
        %1311 = vmatprep.mubr.f32.mxu0 0.0
        %1312 = vmatmul.mubr.f32.gmra.mxu0 %v1212
        %v1313 = vpop.f32.mrf.mxu0
        %v1314 = vadd.f32 0.0, %v1313
        %v1315 = vpop.f32.mrf.mxu0
        %1316 = vmatprep.mubr.f32.mxu0 0.0
        %1317 = vmatmul.mubr.f32.gmra.mxu0 %v1215
        %v1318 = vpop.f32.mrf.mxu0
        %v1319 = vadd.f32 0.0, %v1318
        %v1320 = vpop.f32.mrf.mxu0
        %1321 = vdwg.mxu0
        %v1322 = vsub.f32 0.0, %v1284
        %v1323 = vsub.f32 0.0, %v1289
        %v1324 = vsub.f32 0.0, %v1294
        %v1325 = vsub.f32 0.0, %v1299
        %v1326 = vsub.f32 0.0, %v1304
        %v1327 = vsub.f32 0.0, %v1309
        %v1328 = vsub.f32 0.0, %v1314
        %v1329 = vsub.f32 0.0, %v1319
        %v1330 = vmul.f32 %v1322, 1.442695
        %v1331 = vpow.pop %v1330
        %v1332 = vmul.f32 %v1323, 1.442695
        %v1333 = vpow.pop %v1332
        %v1334 = vmul.f32 %v1324, 1.442695
        %v1335 = vpow.pop %v1334
        %v1336 = vmul.f32 %v1325, 1.442695
        %v1337 = vpow.pop %v1336
        %v1338 = vmul.f32 %v1326, 1.442695
        %v1339 = vpow.pop %v1338
        %v1340 = vmul.f32 %v1327, 1.442695
        %v1341 = vpow.pop %v1340
        %v1342 = vmul.f32 %v1328, 1.442695
        %v1343 = vpow.pop %v1342
        %v1344 = vmul.f32 %v1329, 1.442695
        %v1345 = vpow.pop %v1344
        %v1346 = vadd.f32 %v1331, 1.0
        %v1347 = vadd.f32 %v1333, 1.0
        %v1348 = vadd.f32 %v1335, 1.0
        %v1349 = vadd.f32 %v1337, 1.0
        %v1350 = vadd.f32 %v1339, 1.0
        %v1351 = vadd.f32 %v1341, 1.0
        %v1352 = vadd.f32 %v1343, 1.0
        %v1353 = vadd.f32 %v1345, 1.0
        %v1354 = vrcp.pop %v1346
        %v1355 = vrcp.pop %v1347
        %v1356 = vrcp.pop %v1348
        %v1357 = vrcp.pop %v1349
        %v1358 = vrcp.pop %v1350
        %v1359 = vrcp.pop %v1351
        %v1360 = vrcp.pop %v1352
        %v1361 = vrcp.pop %v1353
        %vm1362 = vcmask 31744
        %v1363 = vsel %vm1362, %v1354, 0.0
        %v1364 = vsel %vm1362, %v1355, 0.0
        %v1365 = vadd.f32 %v1363, %v1364
        %v1366 = vrot.slane %v1365, 4
        %v1367 = vadd.f32 %v1365, %v1366
        %v1368 = vrot.slane %v1367, 2
        %v1369 = vadd.f32 %v1367, %v1368
        %v1370 = vrot.slane %v1369, 1
        %v1371 = vadd.f32 %v1369, %v1370
        %v1372 = vsel %vm1362, %v1356, 0.0
        %v1373 = vsel %vm1362, %v1357, 0.0
        %v1374 = vadd.f32 %v1372, %v1373
        %v1375 = vrot.slane %v1374, 4
        %v1376 = vadd.f32 %v1374, %v1375
        %v1377 = vrot.slane %v1376, 2
        %v1378 = vadd.f32 %v1376, %v1377
        %v1379 = vrot.slane %v1378, 1
        %v1380 = vadd.f32 %v1378, %v1379
        %v1381 = vsel %vm1362, %v1358, 0.0
        %v1382 = vsel %vm1362, %v1359, 0.0
        %v1383 = vadd.f32 %v1381, %v1382
        %v1384 = vrot.slane %v1383, 4
        %v1385 = vadd.f32 %v1383, %v1384
        %v1386 = vrot.slane %v1385, 2
        %v1387 = vadd.f32 %v1385, %v1386
        %v1388 = vrot.slane %v1387, 1
        %v1389 = vadd.f32 %v1387, %v1388
        %v1390 = vsel %vm1362, %v1360, 0.0
        %v1391 = vsel %vm1362, %v1361, 0.0
        %v1392 = vadd.f32 %v1390, %v1391
        %v1393 = vrot.slane %v1392, 4
        %v1394 = vadd.f32 %v1392, %v1393
        %v1395 = vrot.slane %v1394, 2
        %v1396 = vadd.f32 %v1394, %v1395
        %v1397 = vrot.slane %v1396, 1
        %v1398 = vadd.f32 %v1396, %v1397
        %v1399 = vrcp.pop 16.0
        %v1400 = vmul.f32 %v1371, %v1399
        %v1401 = vmul.f32 %v1380, %v1399
        %v1402 = vmul.f32 %v1389, %v1399
        %v1403 = vmul.f32 %v1398, %v1399
        %vm1408 = vcmask 1041409
        %v1409 = vsel %vm1408, %v1401, %v1400
        %vm1410 = vcmask 1042434
        %v1411 = vsel %vm1410, %v1402, %v1409
        %vm1412 = vcmask 1043459
        %v1413 = vsel %vm1412, %v1403, %v1411
        %vm1415 = vcmask 27648
        %1416 = vst.msk [vmem:[%s247] sm:$0xf] %vm1415, %v1413
        %s1417 = sand.u32 %s159, 1
        %s1418 = scalar_lea.sflag [#allocation3], %s1417
        %s1419 = sand.u32 %s159, 1
        %s1420 = smul.addr %s1419, 4
        %s1421 = scalar_lea.vmem [#allocation2], %s1420
        // Predicated region
        $region45: #{tpu_custom_call.1} parent=43 // pred_check
          %p1422 = pneg %p169
        $region46: #{tpu_custom_call.1} parent=43 // pred_check_branch
          %1424 = sbr.rel (%p1422) target = $region48
        $region47: #{tpu_custom_call.1} parent=43 // pred_region
          %s1426 = ssub.s32 64, 64
          %1427 = vsyncadd %s1418, %s1426
          %s1428 = smul.addr %s20, 64
          %s1429 = scalar_lea.hbm %s6, %s1428
          %s1431 = sshll.u32 %s1421, 4
          %s1432 = int_to_ptr.vmem [resolvable:$true] %s1431
          %1434 = dma.vmem_to_hbm [thread:$0]  %s1432, 64, %s1429, %s1418
        $region48: #{tpu_custom_call.1} parent=43 // pred_fallthru
          _
      $region44: #{tpu_custom_call.1} parent=5 // pred_fallthru
        _
      %p1435 = scmp.le.s32.totalorder 2, %s15
      // Predicated region
      $region49: #{tpu_custom_call.1} parent=5 // pred_check
        %p1436 = pneg %p1435
      $region50: #{tpu_custom_call.1} parent=5 // pred_check_branch
        %1438 = sbr.rel (%p1436) target = $region52
      $region51: #{tpu_custom_call.1} parent=5 // pred_region
        %s1439 = ssub.s32 %s15, 2
        // Predicated region
        $region53: #{tpu_custom_call.1} parent=51 // pred_check
          %p1440 = pneg %p175
        $region54: #{tpu_custom_call.1} parent=51 // pred_check_branch
          %1442 = sbr.rel (%p1440) target = $region56
        $region55: #{tpu_custom_call.1} parent=51 // pred_region
          %s1443 = sand.u32 %s160, 1
          %s1444 = scalar_lea.sflag [#allocation3], %s1443
          %s1445 = sand.u32 %s160, 1
          %s1446 = smul.addr %s1445, 4
          %s1447 = scalar_lea.vmem [#allocation2], %s1446
          %1448 = dma.done %s1444, 64
        $region56: #{tpu_custom_call.1} parent=51 // pred_fallthru
          _
      $region52: #{tpu_custom_call.1} parent=5 // pred_fallthru
        _
    $region6: #{tpu_custom_call.1} parent=1 // loop_footer
      %s19 = sadd.s32 1, %s15
    $region7: #{tpu_custom_call.1} parent=1 // loop_footer_branch
      %14 = sbr.rel target = $region3
    $region8: #{tpu_custom_call.1} parent=1 // loop_exit
      _
    %1449 = vsyncpa [#allocation3], 1
    %s1450 = scalar_lea.sflag [#allocation3], 1
    %1451 = vsyncpa %s1450, 1

</llo_original>
